<compile_context>
chip_gen: v7x
topology: tpu7x:2x2x1
jax: 0.10.0
libtpu: 0.0.40
codegen_flags: <defaults>
</compile_context>

<pallas_src>
import functools
import math

import jax
import jax.numpy as jnp
from jax.experimental import pallas as pl
from jax.experimental.pallas import tpu as pltpu


def _self_attention_kernel(x_ref, wgfh_ref, bgfh_ref, wv_ref, bv_ref,
                           gamma_ref, out_ref, g_scr, s_acc,
                           *, cp, tk, compute_dtype):
    k = pl.program_id(1)
    nk = pl.num_programs(1)

    w_all = wgfh_ref[...]          # (3*Cp, C), rows ordered [g; f; h]
    b_all = bgfh_ref[...]          # (3*Cp, 1)

    @pl.when(k == 0)
    def _init():
        # g projection over the full token range, computed once per batch.
        x_full = x_ref[0].astype(compute_dtype)                        # (C, N)
        g_scr[...] = (jnp.dot(w_all[:cp].astype(compute_dtype), x_full,
                              preferred_element_type=jnp.float32)
                      + b_all[:cp])                                    # (Cp, N)
        s_acc[...] = jnp.zeros_like(s_acc)

    # Token tile for this reduction step (tokens of the original f/h operand).
    start = pl.multiple_of(k * tk, tk)
    x_k = x_ref[0, :, pl.ds(start, tk)].astype(compute_dtype)          # (C, tk)

    # Fused f/h projection for this tile: (2*Cp, C) @ (C, tk).
    fh = (jnp.dot(w_all[cp:].astype(compute_dtype), x_k,
                  preferred_element_type=jnp.float32)
          + b_all[cp:])                                                # (2*Cp, tk)
    f_k = fh[:cp]                                                      # (Cp, tk)
    h_k = fh[cp:]                                                      # (Cp, tk)

    # scores[r, j] = sum_c f_k[c, r] * g[c, j]  (contract channel axes; no .T)
    scores = jax.lax.dot_general(
        f_k.astype(compute_dtype), g_scr[...].astype(compute_dtype),
        dimension_numbers=(((0,), (0,)), ((), ())),
        preferred_element_type=jnp.float32)                            # (tk, N)

    # Exact softmax over the last axis (dim=-1 of the torch attention);
    # stats stay in f32, reciprocal goes to the EUP.
    scores = scores - jnp.max(scores, axis=-1, keepdims=True)
    p = jnp.exp(scores)
    p = p * pl.reciprocal(jnp.sum(p, axis=-1, keepdims=True), approx=True)

    # s[c, j] += sum_r h_k[c, r] * att[r, j]   (no transpose needed)
    s_acc[...] += jnp.dot(h_k.astype(compute_dtype), p.astype(compute_dtype),
                          preferred_element_type=jnp.float32)          # (Cp, N)

    @pl.when(k == nk - 1)
    def _finalize():
        v = (jnp.dot(wv_ref[...].astype(compute_dtype),
                     s_acc[...].astype(compute_dtype),
                     preferred_element_type=jnp.float32)
             + bv_ref[...])                                            # (C, N)
        out_ref[0] = (gamma_ref[0, 0] * v).astype(out_ref.dtype)


def _pick_key_tile(n):
    for t in (1024, 512, 256, 128):
        if n % t == 0:
            return t
    return n


def self_attention_pallas(x_nchw, params, *, key_tile=None,
                          compute_dtype=jnp.float32):
    B, C, W, H = x_nchw.shape
    if C % 8 != 0:
        raise ValueError("in_channel must be a multiple of 8")
    N = W * H
    Cp = C // 8
    tk = key_tile if key_tile is not None else _pick_key_tile(N)
    if N % tk != 0:
        raise ValueError(f"key_tile={tk} must divide N={N}")
    n_k = N // tk

    # NCHW -> (B, C, N): free reshape, no transpose (channels-first layout
    # is kept end to end; N lands on the lane axis inside the kernel).
    x = x_nchw.reshape(B, C, N).astype(jnp.float32)

    # Fused projection weights, rows ordered [g; f; h] so g (computed once per
    # batch) and the per-tile f/h pair are contiguous row slices.
    w_gfh = jnp.concatenate(
        [params["wg"], params["wf"], params["wh"]], axis=0).astype(jnp.float32)
    b_gfh = jnp.concatenate(
        [params["bg"], params["bf"], params["bh"]]
    ).reshape(3 * Cp, 1).astype(jnp.float32)
    w_v = params["wv"].astype(jnp.float32)                 # (C, Cp)
    b_v = params["bv"].reshape(C, 1).astype(jnp.float32)
    gamma = params["gamma"].reshape(1, 1).astype(jnp.float32)

    kernel = functools.partial(_self_attention_kernel, cp=Cp, tk=tk,
                               compute_dtype=compute_dtype)

    # Rough VMEM footprint; only raise the scoped limit when actually needed.
    est = 4 * (2 * C * N * 2          # double-buffered x and out blocks
               + 2 * Cp * N           # g / s accumulator scratch
               + 2 * tk * N           # score tile + exp
               + 3 * Cp * C + C * Cp + 4 * Cp + C)
    compiler_kwargs = dict(dimension_semantics=("parallel", "arbitrary"))
    if est > (28 << 20):
        compiler_kwargs["vmem_limit_bytes"] = min(int(est * 1.5), 64 << 20)

    full = lambda r, c: pl.BlockSpec((r, c), lambda b, k: (0, 0))

    out = pl.pallas_call(
        kernel,
        out_shape=jax.ShapeDtypeStruct((B, C, N), jnp.float32),
        grid_spec=pltpu.PrefetchScalarGridSpec(
            num_scalar_prefetch=0,
            grid=(B, n_k),
            in_specs=[
                pl.BlockSpec((1, C, N), lambda b, k: (b, 0, 0)),    # x, per batch
                full(3 * Cp, C), full(3 * Cp, 1),                   # fused g/f/h W, b
                full(C, Cp), full(C, 1),                            # v weight, bias
                pl.BlockSpec(memory_space=pltpu.MemorySpace.SMEM),  # gamma scalar
            ],
            out_specs=pl.BlockSpec((1, C, N), lambda b, k: (b, 0, 0)),
            scratch_shapes=[
                pltpu.VMEM((Cp, N), jnp.float32),   # g projection (per batch)
                pltpu.VMEM((Cp, N), jnp.float32),   # s accumulator
            ]),
        compiler_params=pltpu.CompilerParams(**compiler_kwargs),
    )(x, w_gfh, b_gfh, w_v, b_v, gamma)

    return out.reshape(B, C, W, H)


def self_attention_reference(x_nchw, params):
    """Pure-JAX replica of the PyTorch forward (for validation)."""
    B, C, W, H = x_nchw.shape
    N = W * H
    xf = x_nchw.reshape(B, C, N).astype(jnp.float32)          # (B, C, N)
    conv = lambda w, b: jnp.einsum("oc,bcn->bon", w, xf) + b[None, :, None]
    f = conv(params["wf"], params["bf"])                      # (B, Cp, N)
    g = conv(params["wg"], params["bg"])
    h = conv(params["wh"], params["bh"])
    att = jnp.einsum("bci,bcj->bij", f, g)                    # (B, N, N)
    att = jax.nn.softmax(att, axis=-1)
    s = jnp.einsum("bck,bki->bci", h, att)                    # (B, Cp, N)
    v = jnp.einsum("oc,bcn->bon", params["wv"], s) + params["bv"][None, :, None]
    return (params["gamma"][0] * v).reshape(B, C, W, H)


def init_params(key, C):
    """Deterministic init matching the module shapes (xavier weights, zero bias).
    TODO(synk): torch's default (non-xavier) init for self.v is not replicated
    exactly; it is never re-initialized in the module and gamma=0 zeroes the
    output at init anyway."""
    Cp = C // 8

    def xavier(k, out_c, in_c):
        bound = math.sqrt(6.0 / (in_c + out_c))
        return jax.random.uniform(k, (out_c, in_c), jnp.float32, -bound, bound)

    k = jax.random.split(key, 4)
    return {
        "wf": xavier(k[0], Cp, C), "bf": jnp.zeros((Cp,), jnp.float32),
        "wg": xavier(k[1], Cp, C), "bg": jnp.zeros((Cp,), jnp.float32),
        "wh": xavier(k[2], Cp, C), "bh": jnp.zeros((Cp,), jnp.float32),
        "wv": xavier(k[3], C, Cp), "bv": jnp.zeros((C,), jnp.float32),
        "gamma": jnp.zeros((1,), jnp.float32),   # nn.Parameter(torch.zeros(1))
    }


if __name__ == "__main__":
    key = jax.random.PRNGKey(0)
    k_x, k_p = jax.random.split(key)

    B, C, W, H = 2, 32, 16, 16    # in_channel must be a multiple of 8 (C // 8)
    x = jax.random.normal(k_x, (B, C, W, H), dtype=jnp.float32)
    params = init_params(k_p, C)

    # key_tile=128 -> 2 reduction steps over N=256: exercises init/accum/finalize.
    # gamma = 0 (module default): output must be exactly zero.
    out0 = jax.block_until_ready(self_attention_pallas(x, params, key_tile=128))
    assert out0.shape == (B, C, W, H)
    assert jnp.allclose(out0, 0.0), "gamma=0 output should be exactly zero"

    # Non-zero gamma exercises the full attention path (f32 MXU operands).
    params_nz = dict(params, gamma=jnp.array([0.5], jnp.float32))
    ref = self_attention_reference(x, params_nz)
    scale = float(jnp.max(jnp.abs(ref))) + 1.0

    out_f32 = jax.block_until_ready(
        self_attention_pallas(x, params_nz, key_tile=128))
    err_f32 = float(jnp.max(jnp.abs(out_f32 - ref)))
    assert err_f32 <= 2e-2 * scale, f"f32 mismatch: max abs err {err_f32}"

    # bf16 MXU operands (f32 accumulation / f32 softmax stats): looser tolerance.
    out_bf16 = jax.block_until_ready(
        self_attention_pallas(x, params_nz, key_tile=128,
                              compute_dtype=jnp.bfloat16))
    err_bf16 = float(jnp.max(jnp.abs(out_bf16 - ref)))
    assert err_bf16 <= 1e-1 * scale, f"bf16 mismatch: max abs err {err_bf16}"

    print("KERNEL_OK")
</pallas_src>

<mosaic_0001>
module attributes {stable_mosaic.version = 11 : i64} {
  func.func @_self_attention_kernel(%arg0: i32, %arg1: i32, %arg2: memref<1x32x256xf32, #tpu.memory_space<vmem>>, %arg3: memref<12x32xf32, #tpu.memory_space<vmem>>, %arg4: memref<12x1xf32, #tpu.memory_space<vmem>>, %arg5: memref<32x4xf32, #tpu.memory_space<vmem>>, %arg6: memref<32x1xf32, #tpu.memory_space<vmem>>, %arg7: memref<1x1xf32, #tpu.memory_space<smem>>, %arg8: memref<1x32x256xf32, #tpu.memory_space<vmem>>, %arg9: memref<4x256xf32, #tpu.memory_space<vmem>>, %arg10: memref<4x256xf32, #tpu.memory_space<vmem>>) attributes {dimension_semantics = [#tpu.dimension_semantics<parallel>, #tpu.dimension_semantics<arbitrary>], iteration_bounds = array<i64: 2, 2>, scalar_prefetch = 0 : i64, scratch_operands = 2 : i64, tpu.core_type = #tpu.core_type<tc>, window_params = [{transform_indices = @transform_0, window_bounds = array<i64: 1, 32, 256>}, {pipeline_mode = #tpu.pipeline_mode<synchronous>, transform_indices = @transform_1, window_bounds = array<i64: 12, 32>}, {pipeline_mode = #tpu.pipeline_mode<synchronous>, transform_indices = @transform_2, window_bounds = array<i64: 12, 1>}, {pipeline_mode = #tpu.pipeline_mode<synchronous>, transform_indices = @transform_3, window_bounds = array<i64: 32, 4>}, {pipeline_mode = #tpu.pipeline_mode<synchronous>, transform_indices = @transform_4, window_bounds = array<i64: 32, 1>}, {transform_indices = @transform_5, window_bounds = array<i64: 1, 1>}, {transform_indices = @transform_6, window_bounds = array<i64: 1, 32, 256>}]} {
    %c0 = arith.constant 0 : index
    %c0_0 = arith.constant 0 : index
    %0 = vector.load %arg3[%c0, %c0_0] : memref<12x32xf32, #tpu.memory_space<vmem>>, vector<12x32xf32>
    %c0_1 = arith.constant 0 : index
    %c0_2 = arith.constant 0 : index
    %1 = vector.load %arg4[%c0_1, %c0_2] : memref<12x1xf32, #tpu.memory_space<vmem>>, vector<12x1xf32>
    %c0_i32 = arith.constant 0 : i32
    %2 = arith.cmpi eq, %arg1, %c0_i32 : i32
    %3 = arith.extui %2 : i1 to i32
    %c0_i32_3 = arith.constant 0 : i32
    %4 = arith.cmpi ne, %3, %c0_i32_3 : i32
    scf.if %4 {
      %c0_17 = arith.constant 0 : index
      %c0_18 = arith.constant 0 : index
      %c0_19 = arith.constant 0 : index
      %36 = vector.load %arg2[%c0_17, %c0_18, %c0_19] : memref<1x32x256xf32, #tpu.memory_space<vmem>>, vector<1x32x256xf32>
      %37 = vector.shape_cast %36 : vector<1x32x256xf32> to vector<32x256xf32>
      %38 = vector.extract_strided_slice %0 {offsets = [0, 0], sizes = [4, 32], strides = [1, 1]} : vector<12x32xf32> to vector<4x32xf32>
      %cst_20 = arith.constant dense<0.000000e+00> : vector<4x256xf32>
      %39 = tpu.matmul %38, %37, %cst_20 {dimension_numbers = #tpu.dot_dimension_numbers<[1], [0], [0], [1], [0, 0, 1, 1], [], []>} : vector<4x32xf32>, vector<32x256xf32>, vector<4x256xf32> -> vector<4x256xf32>
      %40 = vector.extract_strided_slice %1 {offsets = [0, 0], sizes = [4, 1], strides = [1, 1]} : vector<12x1xf32> to vector<4x1xf32>
      %41 = vector.broadcast %40 : vector<4x1xf32> to vector<4x256xf32>
      %42 = arith.addf %39, %41 : vector<4x256xf32>
      %c0_21 = arith.constant 0 : index
      %c0_22 = arith.constant 0 : index
      %43 = vector.load %arg9[%c0_21, %c0_22] : memref<4x256xf32, #tpu.memory_space<vmem>>, vector<4x256xf32>
      tpu.vector_store %arg9[%c0_21, %c0_22], %42 {strides = array<i32>} : memref<4x256xf32, #tpu.memory_space<vmem>>, vector<4x256xf32>,
      %cst_23 = arith.constant 0.000000e+00 : f32
      %44 = vector.broadcast %cst_23 : f32 to vector<4x256xf32>
      %c0_24 = arith.constant 0 : index
      %c0_25 = arith.constant 0 : index
      %45 = vector.load %arg10[%c0_24, %c0_25] : memref<4x256xf32, #tpu.memory_space<vmem>>, vector<4x256xf32>
      tpu.vector_store %arg10[%c0_24, %c0_25], %44 {strides = array<i32>} : memref<4x256xf32, #tpu.memory_space<vmem>>, vector<4x256xf32>,
    } else {
    }
    %c128_i32 = arith.constant 128 : i32
    %5 = arith.muli %arg1, %c128_i32 : i32
    %6 = tpu.assume_multiple %5, 128 : i32
    %c0_4 = arith.constant 0 : index
    %c0_5 = arith.constant 0 : index
    %7 = arith.index_cast %6 : i32 to index
    %8 = vector.load %arg2[%c0_4, %c0_5, %7] : memref<1x32x256xf32, #tpu.memory_space<vmem>>, vector<1x32x128xf32>
    %9 = vector.shape_cast %8 : vector<1x32x128xf32> to vector<32x128xf32>
    %10 = vector.extract_strided_slice %0 {offsets = [4, 0], sizes = [8, 32], strides = [1, 1]} : vector<12x32xf32> to vector<8x32xf32>
    %cst = arith.constant dense<0.000000e+00> : vector<8x128xf32>
    %11 = tpu.matmul %10, %9, %cst {dimension_numbers = #tpu.dot_dimension_numbers<[1], [0], [0], [1], [0, 0, 1, 1], [], []>} : vector<8x32xf32>, vector<32x128xf32>, vector<8x128xf32> -> vector<8x128xf32>
    %12 = vector.extract_strided_slice %1 {offsets = [4, 0], sizes = [8, 1], strides = [1, 1]} : vector<12x1xf32> to vector<8x1xf32>
    %13 = vector.broadcast %12 : vector<8x1xf32> to vector<8x128xf32>
    %14 = arith.addf %11, %13 : vector<8x128xf32>
    %15 = vector.extract_strided_slice %14 {offsets = [0, 0], sizes = [4, 128], strides = [1, 1]} : vector<8x128xf32> to vector<4x128xf32>
    %16 = vector.extract_strided_slice %14 {offsets = [4, 0], sizes = [4, 128], strides = [1, 1]} : vector<8x128xf32> to vector<4x128xf32>
    %c0_6 = arith.constant 0 : index
    %c0_7 = arith.constant 0 : index
    %17 = vector.load %arg9[%c0_6, %c0_7] : memref<4x256xf32, #tpu.memory_space<vmem>>, vector<4x256xf32>
    %cst_8 = arith.constant dense<0.000000e+00> : vector<128x256xf32>
    %18 = tpu.matmul %15, %17, %cst_8 {dimension_numbers = #tpu.dot_dimension_numbers<[0], [0], [1], [1], [0, 1, 1, 1], [], []>} : vector<4x128xf32>, vector<4x256xf32>, vector<128x256xf32> -> vector<128x256xf32>
    %cst_9 = arith.constant dense<0xFF800000> : vector<128xf32>
    %19 = vector.multi_reduction <maximumf>, %18, %cst_9 [1] : vector<128x256xf32> to vector<128xf32>
    %20 = vector.shape_cast %19 : vector<128xf32> to vector<128x1xf32>
    %21 = vector.broadcast %20 : vector<128x1xf32> to vector<128x256xf32>
    %22 = arith.subf %18, %21 : vector<128x256xf32>
    %23 = math.exp %22 : vector<128x256xf32>
    %cst_10 = arith.constant dense<0.000000e+00> : vector<128xf32>
    %24 = vector.multi_reduction <add>, %23, %cst_10 [1] : vector<128x256xf32> to vector<128xf32>
    %25 = vector.shape_cast %24 : vector<128xf32> to vector<128x1xf32>
    %26 = tpu.reciprocal %25 {approx = true} : vector<128x1xf32> -> vector<128x1xf32>
    %27 = vector.broadcast %26 : vector<128x1xf32> to vector<128x256xf32>
    %28 = arith.mulf %23, %27 : vector<128x256xf32>
    %c0_11 = arith.constant 0 : index
    %c0_12 = arith.constant 0 : index
    %29 = vector.load %arg10[%c0_11, %c0_12] : memref<4x256xf32, #tpu.memory_space<vmem>>, vector<4x256xf32>
    %cst_13 = arith.constant dense<0.000000e+00> : vector<4x256xf32>
    %30 = tpu.matmul %16, %28, %cst_13 {dimension_numbers = #tpu.dot_dimension_numbers<[1], [0], [0], [1], [0, 0, 1, 1], [], []>} : vector<4x128xf32>, vector<128x256xf32>, vector<4x256xf32> -> vector<4x256xf32>
    %31 = arith.addf %29, %30 : vector<4x256xf32>
    %c0_14 = arith.constant 0 : index
    %c0_15 = arith.constant 0 : index
    %32 = vector.load %arg10[%c0_14, %c0_15] : memref<4x256xf32, #tpu.memory_space<vmem>>, vector<4x256xf32>
    tpu.vector_store %arg10[%c0_14, %c0_15], %31 {strides = array<i32>} : memref<4x256xf32, #tpu.memory_space<vmem>>, vector<4x256xf32>,
    %c1_i32 = arith.constant 1 : i32
    %33 = arith.cmpi eq, %arg1, %c1_i32 : i32
    %34 = arith.extui %33 : i1 to i32
    %c0_i32_16 = arith.constant 0 : i32
    %35 = arith.cmpi ne, %34, %c0_i32_16 : i32
    scf.if %35 {
      %c0_17 = arith.constant 0 : index
      %c0_18 = arith.constant 0 : index
      %36 = vector.load %arg5[%c0_17, %c0_18] : memref<32x4xf32, #tpu.memory_space<vmem>>, vector<32x4xf32>
      %c0_19 = arith.constant 0 : index
      %c0_20 = arith.constant 0 : index
      %37 = vector.load %arg10[%c0_19, %c0_20] : memref<4x256xf32, #tpu.memory_space<vmem>>, vector<4x256xf32>
      %cst_21 = arith.constant dense<0.000000e+00> : vector<32x256xf32>
      %38 = tpu.matmul %36, %37, %cst_21 {dimension_numbers = #tpu.dot_dimension_numbers<[1], [0], [0], [1], [0, 0, 1, 1], [], []>} : vector<32x4xf32>, vector<4x256xf32>, vector<32x256xf32> -> vector<32x256xf32>
      %c0_22 = arith.constant 0 : index
      %c0_23 = arith.constant 0 : index
      %39 = vector.load %arg6[%c0_22, %c0_23] : memref<32x1xf32, #tpu.memory_space<vmem>>, vector<32x1xf32>
      %40 = vector.broadcast %39 : vector<32x1xf32> to vector<32x256xf32>
      %41 = arith.addf %38, %40 : vector<32x256xf32>
      %c0_24 = arith.constant 0 : index
      %c0_25 = arith.constant 0 : index
      %42 = memref.load %arg7[%c0_24, %c0_25] : memref<1x1xf32, #tpu.memory_space<smem>>
      %43 = vector.broadcast %42 : f32 to vector<32x256xf32>
      %44 = arith.mulf %43, %41 : vector<32x256xf32>
      %c0_26 = arith.constant 0 : index
      %c0_27 = arith.constant 0 : index
      %c0_28 = arith.constant 0 : index
      %45 = vector.load %arg8[%c0_26, %c0_27, %c0_28] : memref<1x32x256xf32, #tpu.memory_space<vmem>>, vector<1x32x256xf32>
      %46 = vector.shape_cast %45 : vector<1x32x256xf32> to vector<32x256xf32>
      %47 = vector.shape_cast %44 : vector<32x256xf32> to vector<1x32x256xf32>
      tpu.vector_store %arg8[%c0_26, %c0_27, %c0_28], %47 {strides = array<i32>} : memref<1x32x256xf32, #tpu.memory_space<vmem>>, vector<1x32x256xf32>,
    } else {
    }
    return
  }
  func.func @transform_0(%arg0: i32, %arg1: i32) -> (i32, i32, i32) {
    %c0_i32 = arith.constant 0 : i32
    %c0_i32_0 = arith.constant 0 : i32
    %c0_i32_1 = arith.constant 0 : i32
    return %arg0, %c0_i32, %c0_i32_0 : i32, i32, i32
  }
  func.func @transform_1(%arg0: i32, %arg1: i32) -> (i32, i32) {
    %c0_i32 = arith.constant 0 : i32
    %c0_i32_0 = arith.constant 0 : i32
    %c0_i32_1 = arith.constant 0 : i32
    return %c0_i32, %c0_i32_0 : i32, i32
  }
  func.func @transform_2(%arg0: i32, %arg1: i32) -> (i32, i32) {
    %c0_i32 = arith.constant 0 : i32
    %c0_i32_0 = arith.constant 0 : i32
    %c0_i32_1 = arith.constant 0 : i32
    return %c0_i32, %c0_i32_0 : i32, i32
  }
  func.func @transform_3(%arg0: i32, %arg1: i32) -> (i32, i32) {
    %c0_i32 = arith.constant 0 : i32
    %c0_i32_0 = arith.constant 0 : i32
    %c0_i32_1 = arith.constant 0 : i32
    return %c0_i32, %c0_i32_0 : i32, i32
  }
  func.func @transform_4(%arg0: i32, %arg1: i32) -> (i32, i32) {
    %c0_i32 = arith.constant 0 : i32
    %c0_i32_0 = arith.constant 0 : i32
    %c0_i32_1 = arith.constant 0 : i32
    return %c0_i32, %c0_i32_0 : i32, i32
  }
  func.func @transform_5(%arg0: i32, %arg1: i32) -> (i32, i32) {
    %c0_i32 = arith.constant 0 : i32
    %c0_i32_0 = arith.constant 0 : i32
    %c0_i32_1 = arith.constant 0 : i32
    return %c0_i32, %c0_i32_0 : i32, i32
  }
  func.func @transform_6(%arg0: i32, %arg1: i32) -> (i32, i32, i32) {
    %c0_i32 = arith.constant 0 : i32
    %c0_i32_0 = arith.constant 0 : i32
    %c0_i32_1 = arith.constant 0 : i32
    return %arg0, %c0_i32, %c0_i32_0 : i32, i32, i32
  }
}

</mosaic_0001>

<llo_original>
// kernel: tpu_custom_call.1
$region0: #{tpu_custom_call.1}
  #allocation0 [shape = 'u32[]', space=smem, size = 0x4, offset = 0x4, fixed_abs, tag = 'smem constant byte address 0x4 - core index']
  #allocation1 [shape = 'u32[144,128]{1,0:T(1,128)}', space=vmem, size = 0x12000, scoped, tag = 'internal scratch']
  #allocation2 [shape = 'f32[4,256]{1,0:T(4,128)}', space=vmem, size = 0x1000, scoped, tag = 'scratch operand']
  #allocation3 [shape = 'f32[4,256]{1,0:T(4,128)}', space=vmem, size = 0x1000, scoped, tag = 'scratch operand']
  #allocation4 [shape = 'f32[1,1]{1,0:T(1,128)S(6)}', space=smem, size = 0x200, scoped, tag = 'scoped memory for tpu_custom_call.1']
  %s0 = inlined_call_operand.hbm [shape: f32[2,32,256], index: 0, kind: input, shape index: {}]
  %s1 = inlined_call_operand.vmem [shape: f32[12,32], index: 1, kind: input, shape index: {}]
  %s2 = inlined_call_operand.vmem [shape: f32[12,1], index: 2, kind: input, shape index: {}]
  %s3 = inlined_call_operand.vmem [shape: f32[32,4], index: 3, kind: input, shape index: {}]
  %s4 = inlined_call_operand.vmem [shape: f32[32,1], index: 4, kind: input, shape index: {}]
  %s5 = inlined_call_operand.<no memory space> [shape: f32[1,1], index: 5, kind: input, shape index: {}]
  %s6 = inlined_call_operand.hbm [shape: f32[2,32,256], index: 6, kind: output, shape index: {}]
  %s7 = sld [smem:[#allocation0]]
  $region69: #{tpu_custom_call.1} parent=0
    _
  %s9 = ssub.s32 1, %s7
  %s10 = scalar_select 0, %s9, %s7
  %11 = sst [smem:[#allocation4]] %s5
  $region1: #{tpu_custom_call.1} parent=0
    #allocation5 [shape = 'u8[65536]{0}', space=vmem, size = 0x10000, scoped, tag = 'input window, operand 0']
    #allocation6 [shape = 's32[2]{0}', space=sflag, size = 0x8, scoped, tag = 'scoped memory for tpu_custom_call.1']
    #allocation7 [shape = 's32[2]{0}', space=sflag, size = 0x8, scoped, tag = 'scoped memory for tpu_custom_call.1']
    #allocation8 [shape = 'u8[65536]{0}', space=vmem, size = 0x10000, scoped, tag = 'output window, operand 0']
    %12 = vsyncpa [#allocation6], 0
    %s13 = scalar_lea.sflag [#allocation6], 1
    %14 = vsyncpa %s13, 0
    %15 = vsyncpa [#allocation7], 0
    %s16 = scalar_lea.sflag [#allocation7], 1
    %17 = vsyncpa %s16, 0
    loop: start=0, step=1, limit=6
    $region2: #{tpu_custom_call.1} parent=1 // loop_pre_header
      _
    $region3: #{tpu_custom_call.1} parent=1 // loop_header
      %s19 = sphi 0, %s23
      %p20 = scmp.ge.s32.totalorder %s19, 6
      %s26 = sphi 0, %s38
      %s27 = sphi 0, %s34
      %s28 = sphi 0, %s26
      %s29 = sphi 0, %s27
      %s30 = sphi 0, %s28
      %s31 = sphi 0, %s29
      %s41 = sphi 0, %s43
      %s44 = sphi 0, %s41
      %s45 = sphi 0, %s44
      %s61 = sphi 0, %s45
      %s65 = sphi 0, %s65
      %s67 = sphi 0, %s65
      %s68 = sphi 0, %s67
      %s82 = sphi 0, %s68
      %s86 = sphi 0, %s86
      %s88 = sphi 0, %s86
      %s89 = sphi 0, %s88
      %s103 = sphi 0, %s89
      %s107 = sphi 0, %s107
      %s109 = sphi 0, %s107
      %s110 = sphi 0, %s109
      %s124 = sphi 0, %s110
      %s128 = sphi 0, %s128
      %s130 = sphi 0, %s128
      %s131 = sphi 0, %s130
      %s145 = sphi 0, %s131
      %s149 = sphi 0, %s149
      %s151 = sphi 0, %s149
      %s152 = sphi 0, %s151
      %s166 = sphi 0, %s152
      %s172 = sphi 0, %s174
      %s175 = sphi 0, %s172
      %s176 = sphi 0, %s175
      %s192 = sphi 0, %s176
    $region4: #{tpu_custom_call.1} parent=1 // loop_header_branch
      %22 = sbr.rel (%p20) target = $region8
    $region5: #{tpu_custom_call.1} parent=1 // loop_body
      %s24 = ssub.s32 %s19, 1
      %s25 = ssub.s32 %s19, 2
      %s32 = sadd.s32 1, %s27
      %p33 = scmp.ge.s32.totalorder %s32, 2
      %s34 = scalar_select %p33, 0, %s32
      %s35 = sadd.s32 1, %s26
      %s36 = scalar_select %p33, %s35, %s26
      %p37 = scmp.ge.s32.totalorder %s36, 2
      %s38 = scalar_select %p37, 0, %s36
      %s39 = ssub.s32 %s26, %s38
      %p40 = scmp.eq.s32.totalorder %s39, 0
      %s42 = sadd.s32 %s41, 1
      %s43 = scalar_select %p40, %s41, %s42
      %p46 = pneg %p40
      %p47 = scmp.eq.s32.totalorder %s19, 3
      %p48 = por %p46, %p47
      %p49 = scmp.ne.s32.totalorder %s41, %s44
      %p50 = scmp.eq.s32.totalorder %s19, 0
      %p51 = por %p49, %p50
      %p52 = scmp.ne.s32.totalorder %s41, %s44
      %p53 = scmp.eq.s32.totalorder %s24, 3
      %p54 = por %p52, %p53
      %p55 = scmp.ne.s32.totalorder %s44, %s45
      %p56 = scmp.eq.s32.totalorder %s24, 0
      %p57 = por %p55, %p56
      %p58 = scmp.ne.s32.totalorder %s44, %s45
      %p59 = scmp.eq.s32.totalorder %s25, 3
      %p60 = por %p58, %p59
      %p62 = scmp.ne.s32.totalorder %s45, %s61
      %p63 = scmp.eq.s32.totalorder %s25, 0
      %p64 = por %p62, %p63
      %s66 = sadd.s32 %s65, 1
      %p69 = scmp.eq.s32.totalorder %s19, 3
      %p70 = scmp.ne.s32.totalorder %s65, %s67
      %p71 = scmp.eq.s32.totalorder %s19, 0
      %p72 = por %p70, %p71
      %p73 = scmp.ne.s32.totalorder %s65, %s67
      %p74 = scmp.eq.s32.totalorder %s24, 3
      %p75 = por %p73, %p74
      %p76 = scmp.ne.s32.totalorder %s67, %s68
      %p77 = scmp.eq.s32.totalorder %s24, 0
      %p78 = por %p76, %p77
      %p79 = scmp.ne.s32.totalorder %s67, %s68
      %p80 = scmp.eq.s32.totalorder %s25, 3
      %p81 = por %p79, %p80
      %p83 = scmp.ne.s32.totalorder %s68, %s82
      %p84 = scmp.eq.s32.totalorder %s25, 0
      %p85 = por %p83, %p84
      %s87 = sadd.s32 %s86, 1
      %p90 = scmp.eq.s32.totalorder %s19, 3
      %p91 = scmp.ne.s32.totalorder %s86, %s88
      %p92 = scmp.eq.s32.totalorder %s19, 0
      %p93 = por %p91, %p92
      %p94 = scmp.ne.s32.totalorder %s86, %s88
      %p95 = scmp.eq.s32.totalorder %s24, 3
      %p96 = por %p94, %p95
      %p97 = scmp.ne.s32.totalorder %s88, %s89
      %p98 = scmp.eq.s32.totalorder %s24, 0
      %p99 = por %p97, %p98
      %p100 = scmp.ne.s32.totalorder %s88, %s89
      %p101 = scmp.eq.s32.totalorder %s25, 3
      %p102 = por %p100, %p101
      %p104 = scmp.ne.s32.totalorder %s89, %s103
      %p105 = scmp.eq.s32.totalorder %s25, 0
      %p106 = por %p104, %p105
      %s108 = sadd.s32 %s107, 1
      %p111 = scmp.eq.s32.totalorder %s19, 3
      %p112 = scmp.ne.s32.totalorder %s107, %s109
      %p113 = scmp.eq.s32.totalorder %s19, 0
      %p114 = por %p112, %p113
      %p115 = scmp.ne.s32.totalorder %s107, %s109
      %p116 = scmp.eq.s32.totalorder %s24, 3
      %p117 = por %p115, %p116
      %p118 = scmp.ne.s32.totalorder %s109, %s110
      %p119 = scmp.eq.s32.totalorder %s24, 0
      %p120 = por %p118, %p119
      %p121 = scmp.ne.s32.totalorder %s109, %s110
      %p122 = scmp.eq.s32.totalorder %s25, 3
      %p123 = por %p121, %p122
      %p125 = scmp.ne.s32.totalorder %s110, %s124
      %p126 = scmp.eq.s32.totalorder %s25, 0
      %p127 = por %p125, %p126
      %s129 = sadd.s32 %s128, 1
      %p132 = scmp.eq.s32.totalorder %s19, 3
      %p133 = scmp.ne.s32.totalorder %s128, %s130
      %p134 = scmp.eq.s32.totalorder %s19, 0
      %p135 = por %p133, %p134
      %p136 = scmp.ne.s32.totalorder %s128, %s130
      %p137 = scmp.eq.s32.totalorder %s24, 3
      %p138 = por %p136, %p137
      %p139 = scmp.ne.s32.totalorder %s130, %s131
      %p140 = scmp.eq.s32.totalorder %s24, 0
      %p141 = por %p139, %p140
      %p142 = scmp.ne.s32.totalorder %s130, %s131
      %p143 = scmp.eq.s32.totalorder %s25, 3
      %p144 = por %p142, %p143
      %p146 = scmp.ne.s32.totalorder %s131, %s145
      %p147 = scmp.eq.s32.totalorder %s25, 0
      %p148 = por %p146, %p147
      %s150 = sadd.s32 %s149, 1
      %p153 = scmp.eq.s32.totalorder %s19, 3
      %p154 = scmp.ne.s32.totalorder %s149, %s151
      %p155 = scmp.eq.s32.totalorder %s19, 0
      %p156 = por %p154, %p155
      %p157 = scmp.ne.s32.totalorder %s149, %s151
      %p158 = scmp.eq.s32.totalorder %s24, 3
      %p159 = por %p157, %p158
      %p160 = scmp.ne.s32.totalorder %s151, %s152
      %p161 = scmp.eq.s32.totalorder %s24, 0
      %p162 = por %p160, %p161
      %p163 = scmp.ne.s32.totalorder %s151, %s152
      %p164 = scmp.eq.s32.totalorder %s25, 3
      %p165 = por %p163, %p164
      %p167 = scmp.ne.s32.totalorder %s152, %s166
      %p168 = scmp.eq.s32.totalorder %s25, 0
      %p169 = por %p167, %p168
      %s170 = ssub.s32 %s26, %s38
      %p171 = scmp.eq.s32.totalorder %s170, 0
      %s173 = sadd.s32 %s172, 1
      %s174 = scalar_select %p171, %s172, %s173
      %p177 = pneg %p171
      %p178 = scmp.eq.s32.totalorder %s19, 3
      %p179 = por %p177, %p178
      %p180 = scmp.ne.s32.totalorder %s172, %s175
      %p181 = scmp.eq.s32.totalorder %s19, 0
      %p182 = por %p180, %p181
      %p183 = scmp.ne.s32.totalorder %s172, %s175
      %p184 = scmp.eq.s32.totalorder %s24, 3
      %p185 = por %p183, %p184
      %p186 = scmp.ne.s32.totalorder %s175, %s176
      %p187 = scmp.eq.s32.totalorder %s24, 0
      %p188 = por %p186, %p187
      %p189 = scmp.ne.s32.totalorder %s175, %s176
      %p190 = scmp.eq.s32.totalorder %s25, 3
      %p191 = por %p189, %p190
      %p193 = scmp.ne.s32.totalorder %s176, %s192
      %p194 = scmp.eq.s32.totalorder %s25, 0
      %p195 = por %p193, %p194
      %p196 = scmp.le.s32.totalorder 1, %s19
      %p197 = scmp.lt.s32.totalorder %s19, 5
      %p198 = pnand %p196, %p197
      %p199 = pneg %p198
      // Predicated region
      $region9: #{tpu_custom_call.1} parent=5 // pred_check
        _
      $region10: #{tpu_custom_call.1} parent=5 // pred_check_branch
        %201 = sbr.rel (%p198) target = $region12
      $region11: #{tpu_custom_call.1} parent=5 // pred_region
        %s202 = ssub.s32 %s19, 1
        // Predicated region
        $region13: #{tpu_custom_call.1} parent=11 // pred_check
          %p203 = pneg %p78
        $region14: #{tpu_custom_call.1} parent=11 // pred_check_branch
          %205 = sbr.rel (%p203) target = $region16
        $region15: #{tpu_custom_call.1} parent=11 // pred_region
          _
        $region16: #{tpu_custom_call.1} parent=11 // pred_fallthru
          _
        // Predicated region
        $region17: #{tpu_custom_call.1} parent=11 // pred_check
          %p206 = pneg %p99
        $region18: #{tpu_custom_call.1} parent=11 // pred_check_branch
          %208 = sbr.rel (%p206) target = $region20
        $region19: #{tpu_custom_call.1} parent=11 // pred_region
          _
        $region20: #{tpu_custom_call.1} parent=11 // pred_fallthru
          _
        // Predicated region
        $region21: #{tpu_custom_call.1} parent=11 // pred_check
          %p209 = pneg %p120
        $region22: #{tpu_custom_call.1} parent=11 // pred_check_branch
          %211 = sbr.rel (%p209) target = $region24
        $region23: #{tpu_custom_call.1} parent=11 // pred_region
          _
        $region24: #{tpu_custom_call.1} parent=11 // pred_fallthru
          _
        // Predicated region
        $region25: #{tpu_custom_call.1} parent=11 // pred_check
          %p212 = pneg %p141
        $region26: #{tpu_custom_call.1} parent=11 // pred_check_branch
          %214 = sbr.rel (%p212) target = $region28
        $region27: #{tpu_custom_call.1} parent=11 // pred_region
          _
        $region28: #{tpu_custom_call.1} parent=11 // pred_fallthru
          _
        // Predicated region
        $region29: #{tpu_custom_call.1} parent=11 // pred_check
          %p215 = pneg %p162
        $region30: #{tpu_custom_call.1} parent=11 // pred_check_branch
          %217 = sbr.rel (%p215) target = $region32
        $region31: #{tpu_custom_call.1} parent=11 // pred_region
          _
        $region32: #{tpu_custom_call.1} parent=11 // pred_fallthru
          _
      $region12: #{tpu_custom_call.1} parent=5 // pred_fallthru
        _
      %p218 = scmp.lt.s32.totalorder %s19, 4
      // Predicated region
      $region33: #{tpu_custom_call.1} parent=5 // pred_check
        %p219 = pneg %p218
      $region34: #{tpu_custom_call.1} parent=5 // pred_check_branch
        %221 = sbr.rel (%p219) target = $region36
      $region35: #{tpu_custom_call.1} parent=5 // pred_region
        // Predicated region
        $region37: #{tpu_custom_call.1} parent=35 // pred_check
          %p222 = pneg %p51
        $region38: #{tpu_custom_call.1} parent=35 // pred_check_branch
          %224 = sbr.rel (%p222) target = $region40
        $region39: #{tpu_custom_call.1} parent=35 // pred_region
          %s225 = sand.u32 %s41, 1
          %s226 = scalar_lea.sflag [#allocation6], %s225
          %s227 = sand.u32 %s41, 1
          %s228 = smul.addr %s227, 64
          %s229 = scalar_lea.vmem [#allocation5], %s228
          %s231 = ssub.s32 1024, 1024
          %232 = vsyncadd %s226, %s231
          %s233 = smul.addr %s26, 8
          %s234 = smul.addr %s233, 128
          %s235 = scalar_lea.hbm %s0, %s234
          %s236 = sshll.u32 %s229, 4
          %s237 = int_to_ptr.vmem [resolvable:$true] %s236
          %242 = dma.hbm_to_vmem [thread:$0]  %s235, 1024, %s237, %s226, 256, 256, 16
        $region40: #{tpu_custom_call.1} parent=35 // pred_fallthru
          _
      $region36: #{tpu_custom_call.1} parent=5 // pred_fallthru
        _
      %p243 = scmp.le.s32.totalorder 1, %s19
      %p244 = scmp.lt.s32.totalorder %s19, 5
      %p245 = pnand %p243, %p244
      %p246 = pneg %p245
      // Predicated region
      $region41: #{tpu_custom_call.1} parent=5 // pred_check
        _
      $region42: #{tpu_custom_call.1} parent=5 // pred_check_branch
        %248 = sbr.rel (%p245) target = $region44
      $region43: #{tpu_custom_call.1} parent=5 // pred_region
        %s249 = ssub.s32 %s19, 1
        %s250 = sand.u32 %s44, 1
        %s251 = scalar_lea.sflag [#allocation6], %s250
        %s252 = sand.u32 %s44, 1
        %s253 = smul.addr %s252, 64
        %s254 = scalar_lea.vmem [#allocation5], %s253
        // Predicated region
        $region45: #{tpu_custom_call.1} parent=43 // pred_check
          %p255 = pneg %p57
        $region46: #{tpu_custom_call.1} parent=43 // pred_check_branch
          %257 = sbr.rel (%p255) target = $region48
        $region47: #{tpu_custom_call.1} parent=43 // pred_region
          %258 = dma.done %s251, 1024
        $region48: #{tpu_custom_call.1} parent=43 // pred_fallthru
          _
        %s259 = sand.u32 %s44, 1
        %s260 = scalar_lea.sflag [#allocation6], %s259
        %s261 = sand.u32 %s44, 1
        %s262 = smul.addr %s261, 64
        %s263 = scalar_lea.vmem [#allocation5], %s262
        %p264 = pneg %p57
        %p265 = pneg %p54
        %p266 = pneg %p78
        %p267 = pneg %p75
        %p268 = pneg %p99
        %p269 = pneg %p96
        %p270 = pneg %p120
        %p271 = pneg %p117
        %p272 = pneg %p141
        %p273 = pneg %p138
        %p274 = pneg %p162
        %p275 = pneg %p159
        %p276 = pneg %p188
        %p277 = pneg %p185
        %s278 = sand.u32 %s175, 1
        %s279 = scalar_lea.sflag [#allocation7], %s278
        %s280 = sand.u32 %s175, 1
        %s281 = smul.addr %s280, 64
        %s282 = scalar_lea.vmem [#allocation8], %s281
        %v283 = vld [vmem:[%s1] sm:$0xff]
        %v284 = vld [vmem:[%s1 + $0x8] sm:$0xf]
        %v285 = vld [vmem:[%s2] sm:$0xff]
        %v286 = vld [vmem:[%s2 + $0x8] sm:$0xf]
        %p287 = scmp.eq.s32.totalorder %s29, 0
        // Predicated region
        $region49: #{tpu_custom_call.1} parent=43 // pred_check
          %p288 = pneg %p287
        $region50: #{tpu_custom_call.1} parent=43 // pred_check_branch
          %290 = sbr.rel (%p288) target = $region52
        $region51: #{tpu_custom_call.1} parent=43 // pred_region
          %v291 = vld [vmem:[%s254] sm:$0xff]
          %v292 = vld [vmem:[%s254 + $0x8] sm:$0xff]
          %v293 = vld [vmem:[%s254 + $0x10] sm:$0xff]
          %v294 = vld [vmem:[%s254 + $0x18] sm:$0xff]
          %v295 = vld [vmem:[%s254 + $0x20] sm:$0xff]
          %v296 = vld [vmem:[%s254 + $0x28] sm:$0xff]
          %v297 = vld [vmem:[%s254 + $0x30] sm:$0xff]
          %v298 = vld [vmem:[%s254 + $0x38] sm:$0xff]
          %300 = vset.pattern.permute.xlu0 0
          %301 = vperm.xlu0 %300, %v285
          %v302 = vpop.permute.xlu0 %301
          %vm304 = vcmask 261120
          %v306 = vsel %vm304, %v283, 0
          %308 = vmatprep.subr.mxu0 %v292
          %309 = vmatpush1.msra.mxu0 %v291
          %310 = vmatprep.subr.mxu0 %v294
          %311 = vmatpush1.msra.mxu0 %v293
          %312 = vmatprep.subr.mxu0 %v296
          %313 = vmatpush1.msra.mxu0 %v295
          %314 = vmatprep.subr.mxu0 %v298
          %315 = vmatpush1.msra.mxu0 %v297
          %316 = vmatprep.subr.mxu0 0.0
          %317 = vmatpush1.msra.mxu0 0.0
          %318 = vmatprep.subr.mxu0 0.0
          %319 = vmatpush1.msra.mxu0 0.0
          %320 = vmatprep.subr.mxu0 0.0
          %321 = vmatpush1.msra.mxu0 0.0
          %322 = vmatprep.subr.mxu0 0.0
          %323 = vmatpush1.msra.mxu0 0.0
          %324 = vmatprep.subr.mxu0 0.0
          %325 = vmatpush1.msra.mxu0 0.0
          %326 = vmatprep.subr.mxu0 0.0
          %327 = vmatpush1.msra.mxu0 0.0
          %328 = vmatprep.subr.mxu0 0.0
          %329 = vmatpush1.msra.mxu0 0.0
          %330 = vmatprep.subr.mxu0 0.0
          %331 = vmatpush1.msra.mxu0 0.0
          %332 = vmatprep.subr.mxu0 0.0
          %333 = vmatpush1.msra.mxu0 0.0
          %334 = vmatprep.subr.mxu0 0.0
          %335 = vmatpush1.msra.mxu0 0.0
          %336 = vmatprep.subr.mxu0 0.0
          %337 = vmatpush1.msra.mxu0 0.0
          %338 = vmatprep.subr.mxu0 0.0
          %339 = vmatpush1.msra.mxu0 0.0
          %340 = vmatprep.subr.mxu0 0.0
          %341 = vmatpush1.msra.mxu0 0.0
          %342 = vmatprep.subr.mxu0 0.0
          %343 = vmatpush1.msra.mxu0 0.0
          %344 = vmatprep.subr.mxu0 0.0
          %345 = vmatpush1.msra.mxu0 0.0
          %346 = vmatprep.subr.mxu0 0.0
          %347 = vmatpush1.msra.mxu0 0.0
          %348 = vmatprep.subr.mxu0 0.0
          %349 = vmatpush1.msra.mxu0 0.0
          %350 = vmatprep.subr.mxu0 0.0
          %351 = vmatpush1.msra.mxu0 0.0
          %352 = vmatprep.subr.mxu0 0.0
          %353 = vmatpush1.msra.mxu0 0.0
          %354 = vmatprep.subr.mxu0 0.0
          %355 = vmatpush1.msra.mxu0 0.0
          %356 = vmatprep.subr.mxu0 0.0
          %357 = vmatpush1.msra.mxu0 0.0
          %358 = vmatprep.subr.mxu0 0.0
          %359 = vmatpush1.msra.mxu0 0.0
          %360 = vmatprep.subr.mxu0 0.0
          %361 = vmatpush1.msra.mxu0 0.0
          %362 = vmatprep.subr.mxu0 0.0
          %363 = vmatpush1.msra.mxu0 0.0
          %364 = vmatprep.subr.mxu0 0.0
          %365 = vmatpush1.msra.mxu0 0.0
          %366 = vmatprep.subr.mxu0 0.0
          %367 = vmatpush1.msra.mxu0 0.0
          %368 = vmatprep.subr.mxu0 0.0
          %369 = vmatpush1.msra.mxu0 0.0
          %370 = vmatprep.subr.mxu0 0.0
          %371 = vmatpush1.msra.mxu0 0.0
          %372 = vmatprep.mubr.f32.mxu0 0.0
          %373 = vmatmul.mubr.f32.gmra.mrb[0].mxu0 %v306
          %v374 = vpop.f32.mrb[0].mxu0
          %v375 = vadd.f32 %v302, %v374
          %v376 = vpop.f32.mrb[0].mxu0
          %v377 = vadd.f32 %v302, %v376
          %378 = vdwg.mxu0
          %v381 = vcombine.low %v375, %v377
          %383 = vst [vmem:[#allocation2] sm:$0xff] %v381
          %384 = vst [vmem:[#allocation3] sm:$0xff] 0.0
        $region52: #{tpu_custom_call.1} parent=43 // pred_fallthru
          _
        %s385 = smul.u32 %s29, 128
        %s386 = sshra.s32 %s385, 7
        %s387 = sand.u32 %s385, 127
        %s388 = smul.addr %s386, 8
        %s389 = scalar_lea.vmem %s254, %s388 [#allocation5]
        %v390 = vld [vmem:[%s389] sm:$0xff]
        %v391 = vld [vmem:[%s389 + $0x10] sm:$0xff]
        %v392 = vld [vmem:[%s389 + $0x20] sm:$0xff]
        %v393 = vld [vmem:[%s389 + $0x30] sm:$0xff]
        %395 = vset.pattern.permute.xlu0 0
        %396 = vperm.xlu0 %395, %v285
        %v397 = vpop.permute.xlu0 %396
        %399 = vset.pattern.permute.xlu0 0
        %400 = vperm.xlu0 %399, %v286
        %v401 = vpop.permute.xlu0 %400
        %vm404 = vcmask 1043456
        %v405 = vrot.slane %v283, 4
        %v406 = vrot.slane %v284, 4
        %v407 = vsel %vm404, %v405, %v406
        %v408 = vrot.slane %v397, 4
        %v409 = vrot.slane %v401, 4
        %v410 = vsel %vm404, %v408, %v409
        %vm412 = vcmask 261120
        %v413 = vsel %vm412, %v407, 0
        %415 = vmatprep.subr.mxu0 0.0
        %416 = vmatpush1.msra.mxu0 %v390
        %417 = vmatprep.subr.mxu0 0.0
        %418 = vmatpush1.msra.mxu0 %v391
        %419 = vmatprep.subr.mxu0 0.0
        %420 = vmatpush1.msra.mxu0 %v392
        %421 = vmatprep.subr.mxu0 0.0
        %422 = vmatpush1.msra.mxu0 %v393
        %423 = vmatprep.subr.mxu0 0.0
        %424 = vmatpush1.msra.mxu0 0.0
        %425 = vmatprep.subr.mxu0 0.0
        %426 = vmatpush1.msra.mxu0 0.0
        %427 = vmatprep.subr.mxu0 0.0
        %428 = vmatpush1.msra.mxu0 0.0
        %429 = vmatprep.subr.mxu0 0.0
        %430 = vmatpush1.msra.mxu0 0.0
        %431 = vmatprep.subr.mxu0 0.0
        %432 = vmatpush1.msra.mxu0 0.0
        %433 = vmatprep.subr.mxu0 0.0
        %434 = vmatpush1.msra.mxu0 0.0
        %435 = vmatprep.subr.mxu0 0.0
        %436 = vmatpush1.msra.mxu0 0.0
        %437 = vmatprep.subr.mxu0 0.0
        %438 = vmatpush1.msra.mxu0 0.0
        %439 = vmatprep.subr.mxu0 0.0
        %440 = vmatpush1.msra.mxu0 0.0
        %441 = vmatprep.subr.mxu0 0.0
        %442 = vmatpush1.msra.mxu0 0.0
        %443 = vmatprep.subr.mxu0 0.0
        %444 = vmatpush1.msra.mxu0 0.0
        %445 = vmatprep.subr.mxu0 0.0
        %446 = vmatpush1.msra.mxu0 0.0
        %447 = vmatprep.subr.mxu0 0.0
        %448 = vmatpush1.msra.mxu0 0.0
        %449 = vmatprep.subr.mxu0 0.0
        %450 = vmatpush1.msra.mxu0 0.0
        %451 = vmatprep.subr.mxu0 0.0
        %452 = vmatpush1.msra.mxu0 0.0
        %453 = vmatprep.subr.mxu0 0.0
        %454 = vmatpush1.msra.mxu0 0.0
        %455 = vmatprep.subr.mxu0 0.0
        %456 = vmatpush1.msra.mxu0 0.0
        %457 = vmatprep.subr.mxu0 0.0
        %458 = vmatpush1.msra.mxu0 0.0
        %459 = vmatprep.subr.mxu0 0.0
        %460 = vmatpush1.msra.mxu0 0.0
        %461 = vmatprep.subr.mxu0 0.0
        %462 = vmatpush1.msra.mxu0 0.0
        %463 = vmatprep.subr.mxu0 0.0
        %464 = vmatpush1.msra.mxu0 0.0
        %465 = vmatprep.subr.mxu0 0.0
        %466 = vmatpush1.msra.mxu0 0.0
        %467 = vmatprep.subr.mxu0 0.0
        %468 = vmatpush1.msra.mxu0 0.0
        %469 = vmatprep.subr.mxu0 0.0
        %470 = vmatpush1.msra.mxu0 0.0
        %471 = vmatprep.subr.mxu0 0.0
        %472 = vmatpush1.msra.mxu0 0.0
        %473 = vmatprep.subr.mxu0 0.0
        %474 = vmatpush1.msra.mxu0 0.0
        %475 = vmatprep.subr.mxu0 0.0
        %476 = vmatpush1.msra.mxu0 0.0
        %477 = vmatprep.subr.mxu0 0.0
        %478 = vmatpush1.msra.mxu0 0.0
        %479 = vmatprep.mubr.f32.mxu0 0.0
        %480 = vmatmul.mubr.f32.gmra.mrb[0].mxu0 %v413
        %v481 = vpop.f32.mrb[0].mxu0
        %v482 = vadd.f32 %v410, %v481
        %v483 = vpop.f32.mrb[0].mxu0
        %484 = vdwg.mxu0
        %v485 = vld [vmem:[#allocation2] sm:$0xff]
        %486 = vxpose.xlu0.b32.start [1/16] %v482, 128
        %487 = vxpose.xlu0.b32.cont [2/16] 0.0, 128
        %488 = vxpose.xlu0.b32.cont [3/16] 0.0, 128
        %489 = vxpose.xlu0.b32.cont [4/16] 0.0, 128
        %490 = vxpose.xlu0.b32.cont [5/16] 0.0, 128
        %491 = vxpose.xlu0.b32.cont [6/16] 0.0, 128
        %492 = vxpose.xlu0.b32.cont [7/16] 0.0, 128
        %493 = vxpose.xlu0.b32.cont [8/16] 0.0, 128
        %494 = vxpose.xlu0.b32.cont [9/16] 0.0, 128
        %495 = vxpose.xlu0.b32.cont [10/16] 0.0, 128
        %496 = vxpose.xlu0.b32.cont [11/16] 0.0, 128
        %497 = vxpose.xlu0.b32.cont [12/16] 0.0, 128
        %498 = vxpose.xlu0.b32.cont [13/16] 0.0, 128
        %499 = vxpose.xlu0.b32.cont [14/16] 0.0, 128
        %500 = vxpose.xlu0.b32.cont [15/16] 0.0, 128
        %501 = vxpose.xlu0.b32.end [16/16] 0.0, 128
        %v502 = vpop.trf.xlu0
        %v503 = vpop.trf.xlu0
        %v504 = vpop.trf.xlu0
        %v505 = vpop.trf.xlu0
        %v506 = vpop.trf.xlu0
        %v507 = vpop.trf.xlu0
        %v508 = vpop.trf.xlu0
        %v509 = vpop.trf.xlu0
        %v510 = vpop.trf.xlu0
        %v511 = vpop.trf.xlu0
        %v512 = vpop.trf.xlu0
        %v513 = vpop.trf.xlu0
        %v514 = vpop.trf.xlu0
        %v515 = vpop.trf.xlu0
        %v516 = vpop.trf.xlu0
        %v517 = vpop.trf.xlu0
        %v519 = vcombine.high %v485, %v485
        %vm520 = vcmask 31744
        %v522 = vsel %vm520, %v502, 0
        %v525 = vsel %vm520, %v503, 0
        %v528 = vsel %vm520, %v504, 0
        %v531 = vsel %vm520, %v505, 0
        %v534 = vsel %vm520, %v506, 0
        %v537 = vsel %vm520, %v507, 0
        %v540 = vsel %vm520, %v508, 0
        %v543 = vsel %vm520, %v509, 0
        %v546 = vsel %vm520, %v510, 0
        %v549 = vsel %vm520, %v511, 0
        %v552 = vsel %vm520, %v512, 0
        %v555 = vsel %vm520, %v513, 0
        %v558 = vsel %vm520, %v514, 0
        %v561 = vsel %vm520, %v515, 0
        %v564 = vsel %vm520, %v516, 0
        %v567 = vsel %vm520, %v517, 0
        %v569 = vsel %vm404, %v485, 0
        %v571 = vsel %vm404, %v519, 0
        %573 = vmatprep.subr.mxu0 %v571
        %574 = vmatpush1.msra.mxu0 %v569
        %575 = vmatprep.subr.mxu0 0.0
        %576 = vmatpush1.msra.mxu0 0.0
        %577 = vmatprep.subr.mxu0 0.0
        %578 = vmatpush1.msra.mxu0 0.0
        %579 = vmatprep.subr.mxu0 0.0
        %580 = vmatpush1.msra.mxu0 0.0
        %581 = vmatprep.subr.mxu0 0.0
        %582 = vmatpush1.msra.mxu0 0.0
        %583 = vmatprep.subr.mxu0 0.0
        %584 = vmatpush1.msra.mxu0 0.0
        %585 = vmatprep.subr.mxu0 0.0
        %586 = vmatpush1.msra.mxu0 0.0
        %587 = vmatprep.subr.mxu0 0.0
        %588 = vmatpush1.msra.mxu0 0.0
        %589 = vmatprep.subr.mxu0 0.0
        %590 = vmatpush1.msra.mxu0 0.0
        %591 = vmatprep.subr.mxu0 0.0
        %592 = vmatpush1.msra.mxu0 0.0
        %593 = vmatprep.subr.mxu0 0.0
        %594 = vmatpush1.msra.mxu0 0.0
        %595 = vmatprep.subr.mxu0 0.0
        %596 = vmatpush1.msra.mxu0 0.0
        %597 = vmatprep.subr.mxu0 0.0
        %598 = vmatpush1.msra.mxu0 0.0
        %599 = vmatprep.subr.mxu0 0.0
        %600 = vmatpush1.msra.mxu0 0.0
        %601 = vmatprep.subr.mxu0 0.0
        %602 = vmatpush1.msra.mxu0 0.0
        %603 = vmatprep.subr.mxu0 0.0
        %604 = vmatpush1.msra.mxu0 0.0
        %605 = vmatprep.subr.mxu0 0.0
        %606 = vmatpush1.msra.mxu0 0.0
        %607 = vmatprep.subr.mxu0 0.0
        %608 = vmatpush1.msra.mxu0 0.0
        %609 = vmatprep.subr.mxu0 0.0
        %610 = vmatpush1.msra.mxu0 0.0
        %611 = vmatprep.subr.mxu0 0.0
        %612 = vmatpush1.msra.mxu0 0.0
        %613 = vmatprep.subr.mxu0 0.0
        %614 = vmatpush1.msra.mxu0 0.0
        %615 = vmatprep.subr.mxu0 0.0
        %616 = vmatpush1.msra.mxu0 0.0
        %617 = vmatprep.subr.mxu0 0.0
        %618 = vmatpush1.msra.mxu0 0.0
        %619 = vmatprep.subr.mxu0 0.0
        %620 = vmatpush1.msra.mxu0 0.0
        %621 = vmatprep.subr.mxu0 0.0
        %622 = vmatpush1.msra.mxu0 0.0
        %623 = vmatprep.subr.mxu0 0.0
        %624 = vmatpush1.msra.mxu0 0.0
        %625 = vmatprep.subr.mxu0 0.0
        %626 = vmatpush1.msra.mxu0 0.0
        %627 = vmatprep.subr.mxu0 0.0
        %628 = vmatpush1.msra.mxu0 0.0
        %629 = vmatprep.subr.mxu0 0.0
        %630 = vmatpush1.msra.mxu0 0.0
        %631 = vmatprep.subr.mxu0 0.0
        %632 = vmatpush1.msra.mxu0 0.0
        %633 = vmatprep.subr.mxu0 0.0
        %634 = vmatpush1.msra.mxu0 0.0
        %635 = vmatprep.subr.mxu0 0.0
        %636 = vmatpush1.msra.mxu0 0.0
        %637 = vmatprep.mubr.f32.mxu0 0.0
        %638 = vmatmul.mubr.f32.gmra.mrb[0].mxu0 %v522
        %v639 = vpop.f32.mrb[0].mxu0
        %v640 = vadd.f32 0.0, %v639
        %v641 = vpop.f32.mrb[0].mxu0
        %v642 = vadd.f32 0.0, %v641
        %643 = vmatprep.mubr.f32.mxu0 0.0
        %644 = vmatmul.mubr.f32.gmra.mrb[0].mxu0 %v525
        %v645 = vpop.f32.mrb[0].mxu0
        %v646 = vadd.f32 0.0, %v645
        %v647 = vpop.f32.mrb[0].mxu0
        %v648 = vadd.f32 0.0, %v647
        %649 = vmatprep.mubr.f32.mxu0 0.0
        %650 = vmatmul.mubr.f32.gmra.mrb[0].mxu0 %v528
        %v651 = vpop.f32.mrb[0].mxu0
        %v652 = vadd.f32 0.0, %v651
        %v653 = vpop.f32.mrb[0].mxu0
        %v654 = vadd.f32 0.0, %v653
        %655 = vmatprep.mubr.f32.mxu0 0.0
        %656 = vmatmul.mubr.f32.gmra.mrb[0].mxu0 %v531
        %v657 = vpop.f32.mrb[0].mxu0
        %v658 = vadd.f32 0.0, %v657
        %v659 = vpop.f32.mrb[0].mxu0
        %v660 = vadd.f32 0.0, %v659
        %661 = vmatprep.mubr.f32.mxu0 0.0
        %662 = vmatmul.mubr.f32.gmra.mrb[0].mxu0 %v534
        %v663 = vpop.f32.mrb[0].mxu0
        %v664 = vadd.f32 0.0, %v663
        %v665 = vpop.f32.mrb[0].mxu0
        %v666 = vadd.f32 0.0, %v665
        %667 = vmatprep.mubr.f32.mxu0 0.0
        %668 = vmatmul.mubr.f32.gmra.mrb[0].mxu0 %v537
        %v669 = vpop.f32.mrb[0].mxu0
        %v670 = vadd.f32 0.0, %v669
        %v671 = vpop.f32.mrb[0].mxu0
        %v672 = vadd.f32 0.0, %v671
        %673 = vmatprep.mubr.f32.mxu0 0.0
        %674 = vmatmul.mubr.f32.gmra.mrb[0].mxu0 %v540
        %v675 = vpop.f32.mrb[0].mxu0
        %v676 = vadd.f32 0.0, %v675
        %v677 = vpop.f32.mrb[0].mxu0
        %v678 = vadd.f32 0.0, %v677
        %679 = vmatprep.mubr.f32.mxu0 0.0
        %680 = vmatmul.mubr.f32.gmra.mrb[0].mxu0 %v543
        %v681 = vpop.f32.mrb[0].mxu0
        %v682 = vadd.f32 0.0, %v681
        %v683 = vpop.f32.mrb[0].mxu0
        %v684 = vadd.f32 0.0, %v683
        %685 = vmatprep.mubr.f32.mxu0 0.0
        %686 = vmatmul.mubr.f32.gmra.mrb[0].mxu0 %v546
        %v687 = vpop.f32.mrb[0].mxu0
        %v688 = vadd.f32 0.0, %v687
        %v689 = vpop.f32.mrb[0].mxu0
        %v690 = vadd.f32 0.0, %v689
        %691 = vmatprep.mubr.f32.mxu0 0.0
        %692 = vmatmul.mubr.f32.gmra.mrb[0].mxu0 %v549
        %v693 = vpop.f32.mrb[0].mxu0
        %v694 = vadd.f32 0.0, %v693
        %v695 = vpop.f32.mrb[0].mxu0
        %v696 = vadd.f32 0.0, %v695
        %697 = vmatprep.mubr.f32.mxu0 0.0
        %698 = vmatmul.mubr.f32.gmra.mrb[0].mxu0 %v552
        %v699 = vpop.f32.mrb[0].mxu0
        %v700 = vadd.f32 0.0, %v699
        %v701 = vpop.f32.mrb[0].mxu0
        %v702 = vadd.f32 0.0, %v701
        %703 = vmatprep.mubr.f32.mxu0 0.0
        %704 = vmatmul.mubr.f32.gmra.mrb[0].mxu0 %v555
        %v705 = vpop.f32.mrb[0].mxu0
        %v706 = vadd.f32 0.0, %v705
        %v707 = vpop.f32.mrb[0].mxu0
        %v708 = vadd.f32 0.0, %v707
        %709 = vmatprep.mubr.f32.mxu0 0.0
        %710 = vmatmul.mubr.f32.gmra.mrb[0].mxu0 %v558
        %v711 = vpop.f32.mrb[0].mxu0
        %v712 = vadd.f32 0.0, %v711
        %v713 = vpop.f32.mrb[0].mxu0
        %v714 = vadd.f32 0.0, %v713
        %715 = vmatprep.mubr.f32.mxu0 0.0
        %716 = vmatmul.mubr.f32.gmra.mrb[0].mxu0 %v561
        %v717 = vpop.f32.mrb[0].mxu0
        %v718 = vadd.f32 0.0, %v717
        %v719 = vpop.f32.mrb[0].mxu0
        %v720 = vadd.f32 0.0, %v719
        %721 = vmatprep.mubr.f32.mxu0 0.0
        %722 = vmatmul.mubr.f32.gmra.mrb[0].mxu0 %v564
        %v723 = vpop.f32.mrb[0].mxu0
        %v724 = vadd.f32 0.0, %v723
        %v725 = vpop.f32.mrb[0].mxu0
        %v726 = vadd.f32 0.0, %v725
        %727 = vmatprep.mubr.f32.mxu0 0.0
        %728 = vmatmul.mubr.f32.gmra.mrb[0].mxu0 %v567
        %v729 = vpop.f32.mrb[0].mxu0
        %v730 = vadd.f32 0.0, %v729
        %v731 = vpop.f32.mrb[0].mxu0
        %v732 = vadd.f32 0.0, %v731
        %733 = vdwg.mxu0
        %v734 = vmax.f32 %v640, %v642
        %735 = vmax.xlane.f32.xlu0 %v734
        %v736 = vpop.xlane.xlu0 %735
        %v737 = vmax.f32 %v646, %v648
        %738 = vmax.xlane.f32.xlu0 %v737
        %v739 = vpop.xlane.xlu0 %738
        %v740 = vmax.f32 %v652, %v654
        %741 = vmax.xlane.f32.xlu0 %v740
        %v742 = vpop.xlane.xlu0 %741
        %v743 = vmax.f32 %v658, %v660
        %744 = vmax.xlane.f32.xlu0 %v743
        %v745 = vpop.xlane.xlu0 %744
        %v746 = vmax.f32 %v664, %v666
        %747 = vmax.xlane.f32.xlu0 %v746
        %v748 = vpop.xlane.xlu0 %747
        %v749 = vmax.f32 %v670, %v672
        %750 = vmax.xlane.f32.xlu0 %v749
        %v751 = vpop.xlane.xlu0 %750
        %v752 = vmax.f32 %v676, %v678
        %753 = vmax.xlane.f32.xlu0 %v752
        %v754 = vpop.xlane.xlu0 %753
        %v755 = vmax.f32 %v682, %v684
        %756 = vmax.xlane.f32.xlu0 %v755
        %v757 = vpop.xlane.xlu0 %756
        %v758 = vmax.f32 %v688, %v690
        %759 = vmax.xlane.f32.xlu0 %v758
        %v760 = vpop.xlane.xlu0 %759
        %v761 = vmax.f32 %v694, %v696
        %762 = vmax.xlane.f32.xlu0 %v761
        %v763 = vpop.xlane.xlu0 %762
        %v764 = vmax.f32 %v700, %v702
        %765 = vmax.xlane.f32.xlu0 %v764
        %v766 = vpop.xlane.xlu0 %765
        %v767 = vmax.f32 %v706, %v708
        %768 = vmax.xlane.f32.xlu0 %v767
        %v769 = vpop.xlane.xlu0 %768
        %v770 = vmax.f32 %v712, %v714
        %771 = vmax.xlane.f32.xlu0 %v770
        %v772 = vpop.xlane.xlu0 %771
        %v773 = vmax.f32 %v718, %v720
        %774 = vmax.xlane.f32.xlu0 %v773
        %v775 = vpop.xlane.xlu0 %774
        %v776 = vmax.f32 %v724, %v726
        %777 = vmax.xlane.f32.xlu0 %v776
        %v778 = vpop.xlane.xlu0 %777
        %v779 = vmax.f32 %v730, %v732
        %780 = vmax.xlane.f32.xlu0 %v779
        %v781 = vpop.xlane.xlu0 %780
        %v782 = vsub.f32 %v640, %v736
        %v783 = vsub.f32 %v642, %v736
        %v784 = vsub.f32 %v646, %v739
        %v785 = vsub.f32 %v648, %v739
        %v786 = vsub.f32 %v652, %v742
        %v787 = vsub.f32 %v654, %v742
        %v788 = vsub.f32 %v658, %v745
        %v789 = vsub.f32 %v660, %v745
        %v790 = vsub.f32 %v664, %v748
        %v791 = vsub.f32 %v666, %v748
        %v792 = vsub.f32 %v670, %v751
        %v793 = vsub.f32 %v672, %v751
        %v794 = vsub.f32 %v676, %v754
        %v795 = vsub.f32 %v678, %v754
        %v796 = vsub.f32 %v682, %v757
        %v797 = vsub.f32 %v684, %v757
        %v798 = vsub.f32 %v688, %v760
        %v799 = vsub.f32 %v690, %v760
        %v800 = vsub.f32 %v694, %v763
        %v801 = vsub.f32 %v696, %v763
        %v802 = vsub.f32 %v700, %v766
        %v803 = vsub.f32 %v702, %v766
        %v804 = vsub.f32 %v706, %v769
        %v805 = vsub.f32 %v708, %v769
        %v806 = vsub.f32 %v712, %v772
        %v807 = vsub.f32 %v714, %v772
        %v808 = vsub.f32 %v718, %v775
        %v809 = vsub.f32 %v720, %v775
        %v810 = vsub.f32 %v724, %v778
        %v811 = vsub.f32 %v726, %v778
        %v812 = vsub.f32 %v730, %v781
        %v813 = vsub.f32 %v732, %v781
        %v814 = vmul.f32 %v782, 1.442695
        %v815 = vpow.pop %v814
        %v816 = vmul.f32 %v783, 1.442695
        %v817 = vpow.pop %v816
        %v818 = vmul.f32 %v784, 1.442695
        %v819 = vpow.pop %v818
        %v820 = vmul.f32 %v785, 1.442695
        %v821 = vpow.pop %v820
        %v822 = vmul.f32 %v786, 1.442695
        %v823 = vpow.pop %v822
        %v824 = vmul.f32 %v787, 1.442695
        %v825 = vpow.pop %v824
        %v826 = vmul.f32 %v788, 1.442695
        %v827 = vpow.pop %v826
        %v828 = vmul.f32 %v789, 1.442695
        %v829 = vpow.pop %v828
        %v830 = vmul.f32 %v790, 1.442695
        %v831 = vpow.pop %v830
        %v832 = vmul.f32 %v791, 1.442695
        %v833 = vpow.pop %v832
        %v834 = vmul.f32 %v792, 1.442695
        %v835 = vpow.pop %v834
        %v836 = vmul.f32 %v793, 1.442695
        %v837 = vpow.pop %v836
        %v838 = vmul.f32 %v794, 1.442695
        %v839 = vpow.pop %v838
        %v840 = vmul.f32 %v795, 1.442695
        %v841 = vpow.pop %v840
        %v842 = vmul.f32 %v796, 1.442695
        %v843 = vpow.pop %v842
        %v844 = vmul.f32 %v797, 1.442695
        %v845 = vpow.pop %v844
        %v846 = vmul.f32 %v798, 1.442695
        %v847 = vpow.pop %v846
        %v848 = vmul.f32 %v799, 1.442695
        %v849 = vpow.pop %v848
        %v850 = vmul.f32 %v800, 1.442695
        %v851 = vpow.pop %v850
        %v852 = vmul.f32 %v801, 1.442695
        %v853 = vpow.pop %v852
        %v854 = vmul.f32 %v802, 1.442695
        %v855 = vpow.pop %v854
        %v856 = vmul.f32 %v803, 1.442695
        %v857 = vpow.pop %v856
        %v858 = vmul.f32 %v804, 1.442695
        %v859 = vpow.pop %v858
        %v860 = vmul.f32 %v805, 1.442695
        %v861 = vpow.pop %v860
        %v862 = vmul.f32 %v806, 1.442695
        %v863 = vpow.pop %v862
        %v864 = vmul.f32 %v807, 1.442695
        %v865 = vpow.pop %v864
        %v866 = vmul.f32 %v808, 1.442695
        %v867 = vpow.pop %v866
        %v868 = vmul.f32 %v809, 1.442695
        %v869 = vpow.pop %v868
        %v870 = vmul.f32 %v810, 1.442695
        %v871 = vpow.pop %v870
        %v872 = vmul.f32 %v811, 1.442695
        %v873 = vpow.pop %v872
        %v874 = vmul.f32 %v812, 1.442695
        %v875 = vpow.pop %v874
        %v876 = vmul.f32 %v813, 1.442695
        %v877 = vpow.pop %v876
        %v878 = vadd.f32 %v815, %v817
        %879 = vadd.xlane.f32.xlu0 %v878
        %v880 = vpop.xlane.xlu0 %879
        %v881 = vadd.f32 %v819, %v821
        %882 = vadd.xlane.f32.xlu0 %v881
        %v883 = vpop.xlane.xlu0 %882
        %v884 = vadd.f32 %v823, %v825
        %885 = vadd.xlane.f32.xlu0 %v884
        %v886 = vpop.xlane.xlu0 %885
        %v887 = vadd.f32 %v827, %v829
        %888 = vadd.xlane.f32.xlu0 %v887
        %v889 = vpop.xlane.xlu0 %888
        %v890 = vadd.f32 %v831, %v833
        %891 = vadd.xlane.f32.xlu0 %v890
        %v892 = vpop.xlane.xlu0 %891
        %v893 = vadd.f32 %v835, %v837
        %894 = vadd.xlane.f32.xlu0 %v893
        %v895 = vpop.xlane.xlu0 %894
        %v896 = vadd.f32 %v839, %v841
        %897 = vadd.xlane.f32.xlu0 %v896
        %v898 = vpop.xlane.xlu0 %897
        %v899 = vadd.f32 %v843, %v845
        %900 = vadd.xlane.f32.xlu0 %v899
        %v901 = vpop.xlane.xlu0 %900
        %v902 = vadd.f32 %v847, %v849
        %903 = vadd.xlane.f32.xlu0 %v902
        %v904 = vpop.xlane.xlu0 %903
        %v905 = vadd.f32 %v851, %v853
        %906 = vadd.xlane.f32.xlu0 %v905
        %v907 = vpop.xlane.xlu0 %906
        %v908 = vadd.f32 %v855, %v857
        %909 = vadd.xlane.f32.xlu0 %v908
        %v910 = vpop.xlane.xlu0 %909
        %v911 = vadd.f32 %v859, %v861
        %912 = vadd.xlane.f32.xlu0 %v911
        %v913 = vpop.xlane.xlu0 %912
        %v914 = vadd.f32 %v863, %v865
        %915 = vadd.xlane.f32.xlu0 %v914
        %v916 = vpop.xlane.xlu0 %915
        %v917 = vadd.f32 %v867, %v869
        %918 = vadd.xlane.f32.xlu0 %v917
        %v919 = vpop.xlane.xlu0 %918
        %v920 = vadd.f32 %v871, %v873
        %921 = vadd.xlane.f32.xlu0 %v920
        %v922 = vpop.xlane.xlu0 %921
        %v923 = vadd.f32 %v875, %v877
        %924 = vadd.xlane.f32.xlu0 %v923
        %v925 = vpop.xlane.xlu0 %924
        %v926 = vrcp.pop %v880
        %v927 = vrcp.pop %v883
        %v928 = vrcp.pop %v886
        %v929 = vrcp.pop %v889
        %v930 = vrcp.pop %v892
        %v931 = vrcp.pop %v895
        %v932 = vrcp.pop %v898
        %v933 = vrcp.pop %v901
        %v934 = vrcp.pop %v904
        %v935 = vrcp.pop %v907
        %v936 = vrcp.pop %v910
        %v937 = vrcp.pop %v913
        %v938 = vrcp.pop %v916
        %v939 = vrcp.pop %v919
        %v940 = vrcp.pop %v922
        %v941 = vrcp.pop %v925
        %v942 = vmul.f32 %v815, %v926
        %v943 = vmul.f32 %v817, %v926
        %v944 = vmul.f32 %v819, %v927
        %v945 = vmul.f32 %v821, %v927
        %v946 = vmul.f32 %v823, %v928
        %v947 = vmul.f32 %v825, %v928
        %v948 = vmul.f32 %v827, %v929
        %v949 = vmul.f32 %v829, %v929
        %v950 = vmul.f32 %v831, %v930
        %v951 = vmul.f32 %v833, %v930
        %v952 = vmul.f32 %v835, %v931
        %v953 = vmul.f32 %v837, %v931
        %v954 = vmul.f32 %v839, %v932
        %v955 = vmul.f32 %v841, %v932
        %v956 = vmul.f32 %v843, %v933
        %v957 = vmul.f32 %v845, %v933
        %v958 = vmul.f32 %v847, %v934
        %v959 = vmul.f32 %v849, %v934
        %v960 = vmul.f32 %v851, %v935
        %v961 = vmul.f32 %v853, %v935
        %v962 = vmul.f32 %v855, %v936
        %v963 = vmul.f32 %v857, %v936
        %v964 = vmul.f32 %v859, %v937
        %v965 = vmul.f32 %v861, %v937
        %v966 = vmul.f32 %v863, %v938
        %v967 = vmul.f32 %v865, %v938
        %v968 = vmul.f32 %v867, %v939
        %v969 = vmul.f32 %v869, %v939
        %v970 = vmul.f32 %v871, %v940
        %v971 = vmul.f32 %v873, %v940
        %v972 = vmul.f32 %v875, %v941
        %v973 = vmul.f32 %v877, %v941
        %v974 = vld [vmem:[#allocation3] sm:$0xff]
        %v976 = vrot.slane %v482, 4
        %978 = vmatprep.subr.mxu0 %v943
        %979 = vmatpush1.msra.mxu0 %v942
        %980 = vmatprep.subr.mxu0 %v945
        %981 = vmatpush1.msra.mxu0 %v944
        %982 = vmatprep.subr.mxu0 %v947
        %983 = vmatpush1.msra.mxu0 %v946
        %984 = vmatprep.subr.mxu0 %v949
        %985 = vmatpush1.msra.mxu0 %v948
        %986 = vmatprep.subr.mxu0 %v951
        %987 = vmatpush1.msra.mxu0 %v950
        %988 = vmatprep.subr.mxu0 %v953
        %989 = vmatpush1.msra.mxu0 %v952
        %990 = vmatprep.subr.mxu0 %v955
        %991 = vmatpush1.msra.mxu0 %v954
        %992 = vmatprep.subr.mxu0 %v957
        %993 = vmatpush1.msra.mxu0 %v956
        %994 = vmatprep.subr.mxu0 %v959
        %995 = vmatpush1.msra.mxu0 %v958
        %996 = vmatprep.subr.mxu0 %v961
        %997 = vmatpush1.msra.mxu0 %v960
        %998 = vmatprep.subr.mxu0 %v963
        %999 = vmatpush1.msra.mxu0 %v962
        %1000 = vmatprep.subr.mxu0 %v965
        %1001 = vmatpush1.msra.mxu0 %v964
        %1002 = vmatprep.subr.mxu0 %v967
        %1003 = vmatpush1.msra.mxu0 %v966
        %1004 = vmatprep.subr.mxu0 %v969
        %1005 = vmatpush1.msra.mxu0 %v968
        %1006 = vmatprep.subr.mxu0 %v971
        %1007 = vmatpush1.msra.mxu0 %v970
        %1008 = vmatprep.subr.mxu0 %v973
        %1009 = vmatpush1.msra.mxu0 %v972
        %1010 = vmatprep.subr.mxu0 0.0
        %1011 = vmatpush1.msra.mxu0 0.0
        %1012 = vmatprep.subr.mxu0 0.0
        %1013 = vmatpush1.msra.mxu0 0.0
        %1014 = vmatprep.subr.mxu0 0.0
        %1015 = vmatpush1.msra.mxu0 0.0
        %1016 = vmatprep.subr.mxu0 0.0
        %1017 = vmatpush1.msra.mxu0 0.0
        %1018 = vmatprep.subr.mxu0 0.0
        %1019 = vmatpush1.msra.mxu0 0.0
        %1020 = vmatprep.subr.mxu0 0.0
        %1021 = vmatpush1.msra.mxu0 0.0
        %1022 = vmatprep.subr.mxu0 0.0
        %1023 = vmatpush1.msra.mxu0 0.0
        %1024 = vmatprep.subr.mxu0 0.0
        %1025 = vmatpush1.msra.mxu0 0.0
        %1026 = vmatprep.subr.mxu0 0.0
        %1027 = vmatpush1.msra.mxu0 0.0
        %1028 = vmatprep.subr.mxu0 0.0
        %1029 = vmatpush1.msra.mxu0 0.0
        %1030 = vmatprep.subr.mxu0 0.0
        %1031 = vmatpush1.msra.mxu0 0.0
        %1032 = vmatprep.subr.mxu0 0.0
        %1033 = vmatpush1.msra.mxu0 0.0
        %1034 = vmatprep.subr.mxu0 0.0
        %1035 = vmatpush1.msra.mxu0 0.0
        %1036 = vmatprep.subr.mxu0 0.0
        %1037 = vmatpush1.msra.mxu0 0.0
        %1038 = vmatprep.subr.mxu0 0.0
        %1039 = vmatpush1.msra.mxu0 0.0
        %1040 = vmatprep.subr.mxu0 0.0
        %1041 = vmatpush1.msra.mxu0 0.0
        %1042 = vmatprep.mubr.f32.mxu0 0.0
        %1043 = vmatmul.mubr.f32.gmra.mrb[0].mxu0 %v976
        %v1044 = vpop.f32.mrb[0].mxu0
        %v1045 = vadd.f32 0.0, %v1044
        %v1046 = vpop.f32.mrb[0].mxu0
        %v1047 = vadd.f32 0.0, %v1046
        %1048 = vdwg.mxu0
        %v1051 = vcombine.low %v1045, %v1047
        %v1053 = vadd.f32 %v974, %v1051
        %1054 = vst [vmem:[#allocation3] sm:$0xff] %v1053
        %p1055 = scmp.eq.s32.totalorder %s29, 1
        // Predicated region
        $region53: #{tpu_custom_call.1} parent=43 // pred_check
          %p1056 = pneg %p1055
        $region54: #{tpu_custom_call.1} parent=43 // pred_check_branch
          %1058 = sbr.rel (%p1056) target = $region56
        $region55: #{tpu_custom_call.1} parent=43 // pred_region
          %v1059 = vld [vmem:[%s3] sm:$0xff]
          %v1060 = vld [vmem:[%s3 + $0x8] sm:$0xff]
          %v1061 = vld [vmem:[%s3 + $0x10] sm:$0xff]
          %v1062 = vld [vmem:[%s3 + $0x18] sm:$0xff]
          %v1063 = vld [vmem:[#allocation3] sm:$0xff]
          %v1064 = vld [vmem:[%s4] sm:$0xff]
          %v1065 = vld [vmem:[%s4 + $0x8] sm:$0xff]
          %v1066 = vld [vmem:[%s4 + $0x10] sm:$0xff]
          %v1067 = vld [vmem:[%s4 + $0x18] sm:$0xff]
          %1069 = vset.pattern.permute.xlu0 0
          %1070 = vperm.xlu0 %1069, %v1064
          %v1071 = vpop.permute.xlu0 %1070
          %1074 = vset.pattern.permute.xlu0 0
          %1075 = vperm.xlu0 %1074, %v1065
          %v1076 = vpop.permute.xlu0 %1075
          %1079 = vset.pattern.permute.xlu0 0
          %1080 = vperm.xlu0 %1079, %v1066
          %v1081 = vpop.permute.xlu0 %1080
          %1084 = vset.pattern.permute.xlu0 0
          %1085 = vperm.xlu0 %1084, %v1067
          %v1086 = vpop.permute.xlu0 %1085
          %v1089 = vcombine.high %v1063, %v1063
          %v1091 = vsel %vm520, %v1059, 0
          %v1094 = vsel %vm520, %v1060, 0
          %v1097 = vsel %vm520, %v1061, 0
          %v1100 = vsel %vm520, %v1062, 0
          %v1102 = vsel %vm404, %v1063, 0
          %v1104 = vsel %vm404, %v1089, 0
          %1106 = vmatprep.subr.mxu0 %v1104
          %1107 = vmatpush1.msra.mxu0 %v1102
          %1108 = vmatprep.subr.mxu0 0.0
          %1109 = vmatpush1.msra.mxu0 0.0
          %1110 = vmatprep.subr.mxu0 0.0
          %1111 = vmatpush1.msra.mxu0 0.0
          %1112 = vmatprep.subr.mxu0 0.0
          %1113 = vmatpush1.msra.mxu0 0.0
          %1114 = vmatprep.subr.mxu0 0.0
          %1115 = vmatpush1.msra.mxu0 0.0
          %1116 = vmatprep.subr.mxu0 0.0
          %1117 = vmatpush1.msra.mxu0 0.0
          %1118 = vmatprep.subr.mxu0 0.0
          %1119 = vmatpush1.msra.mxu0 0.0
          %1120 = vmatprep.subr.mxu0 0.0
          %1121 = vmatpush1.msra.mxu0 0.0
          %1122 = vmatprep.subr.mxu0 0.0
          %1123 = vmatpush1.msra.mxu0 0.0
          %1124 = vmatprep.subr.mxu0 0.0
          %1125 = vmatpush1.msra.mxu0 0.0
          %1126 = vmatprep.subr.mxu0 0.0
          %1127 = vmatpush1.msra.mxu0 0.0
          %1128 = vmatprep.subr.mxu0 0.0
          %1129 = vmatpush1.msra.mxu0 0.0
          %1130 = vmatprep.subr.mxu0 0.0
          %1131 = vmatpush1.msra.mxu0 0.0
          %1132 = vmatprep.subr.mxu0 0.0
          %1133 = vmatpush1.msra.mxu0 0.0
          %1134 = vmatprep.subr.mxu0 0.0
          %1135 = vmatpush1.msra.mxu0 0.0
          %1136 = vmatprep.subr.mxu0 0.0
          %1137 = vmatpush1.msra.mxu0 0.0
          %1138 = vmatprep.subr.mxu0 0.0
          %1139 = vmatpush1.msra.mxu0 0.0
          %1140 = vmatprep.subr.mxu0 0.0
          %1141 = vmatpush1.msra.mxu0 0.0
          %1142 = vmatprep.subr.mxu0 0.0
          %1143 = vmatpush1.msra.mxu0 0.0
          %1144 = vmatprep.subr.mxu0 0.0
          %1145 = vmatpush1.msra.mxu0 0.0
          %1146 = vmatprep.subr.mxu0 0.0
          %1147 = vmatpush1.msra.mxu0 0.0
          %1148 = vmatprep.subr.mxu0 0.0
          %1149 = vmatpush1.msra.mxu0 0.0
          %1150 = vmatprep.subr.mxu0 0.0
          %1151 = vmatpush1.msra.mxu0 0.0
          %1152 = vmatprep.subr.mxu0 0.0
          %1153 = vmatpush1.msra.mxu0 0.0
          %1154 = vmatprep.subr.mxu0 0.0
          %1155 = vmatpush1.msra.mxu0 0.0
          %1156 = vmatprep.subr.mxu0 0.0
          %1157 = vmatpush1.msra.mxu0 0.0
          %1158 = vmatprep.subr.mxu0 0.0
          %1159 = vmatpush1.msra.mxu0 0.0
          %1160 = vmatprep.subr.mxu0 0.0
          %1161 = vmatpush1.msra.mxu0 0.0
          %1162 = vmatprep.subr.mxu0 0.0
          %1163 = vmatpush1.msra.mxu0 0.0
          %1164 = vmatprep.subr.mxu0 0.0
          %1165 = vmatpush1.msra.mxu0 0.0
          %1166 = vmatprep.subr.mxu0 0.0
          %1167 = vmatpush1.msra.mxu0 0.0
          %1168 = vmatprep.subr.mxu0 0.0
          %1169 = vmatpush1.msra.mxu0 0.0
          %1170 = vmatprep.mubr.f32.mxu0 0.0
          %1171 = vmatmul.mubr.f32.gmra.mrb[0].mxu0 %v1091
          %v1172 = vpop.f32.mrb[0].mxu0
          %v1173 = vadd.f32 %v1071, %v1172
          %v1174 = vpop.f32.mrb[0].mxu0
          %v1175 = vadd.f32 %v1071, %v1174
          %1176 = vmatprep.mubr.f32.mxu0 0.0
          %1177 = vmatmul.mubr.f32.gmra.mrb[0].mxu0 %v1094
          %v1178 = vpop.f32.mrb[0].mxu0
          %v1179 = vadd.f32 %v1076, %v1178
          %v1180 = vpop.f32.mrb[0].mxu0
          %v1181 = vadd.f32 %v1076, %v1180
          %1182 = vmatprep.mubr.f32.mxu0 0.0
          %1183 = vmatmul.mubr.f32.gmra.mrb[0].mxu0 %v1097
          %v1184 = vpop.f32.mrb[0].mxu0
          %v1185 = vadd.f32 %v1081, %v1184
          %v1186 = vpop.f32.mrb[0].mxu0
          %v1187 = vadd.f32 %v1081, %v1186
          %1188 = vmatprep.mubr.f32.mxu0 0.0
          %1189 = vmatmul.mubr.f32.gmra.mrb[0].mxu0 %v1100
          %v1190 = vpop.f32.mrb[0].mxu0
          %v1191 = vadd.f32 %v1086, %v1190
          %v1192 = vpop.f32.mrb[0].mxu0
          %v1193 = vadd.f32 %v1086, %v1192
          %1194 = vdwg.mxu0
          %s1195 = sld [smem:[#allocation4]]
          %v1196 = vstv %s1195
          %v1197 = vmul.f32 %v1196, %v1173
          %v1198 = vmul.f32 %v1196, %v1175
          %v1199 = vmul.f32 %v1196, %v1179
          %v1200 = vmul.f32 %v1196, %v1181
          %v1201 = vmul.f32 %v1196, %v1185
          %v1202 = vmul.f32 %v1196, %v1187
          %v1203 = vmul.f32 %v1196, %v1191
          %v1204 = vmul.f32 %v1196, %v1193
          %1205 = vst [vmem:[%s282] sm:$0xff] %v1197
          %1206 = vst [vmem:[%s282 + $0x8] sm:$0xff] %v1198
          %1207 = vst [vmem:[%s282 + $0x10] sm:$0xff] %v1199
          %1208 = vst [vmem:[%s282 + $0x18] sm:$0xff] %v1200
          %1209 = vst [vmem:[%s282 + $0x20] sm:$0xff] %v1201
          %1210 = vst [vmem:[%s282 + $0x28] sm:$0xff] %v1202
          %1211 = vst [vmem:[%s282 + $0x30] sm:$0xff] %v1203
          %1212 = vst [vmem:[%s282 + $0x38] sm:$0xff] %v1204
        $region56: #{tpu_custom_call.1} parent=43 // pred_fallthru
          _
        %s1213 = sand.u32 %s175, 1
        %s1214 = scalar_lea.sflag [#allocation7], %s1213
        %s1215 = sand.u32 %s175, 1
        %s1216 = smul.addr %s1215, 64
        %s1217 = scalar_lea.vmem [#allocation8], %s1216
        // Predicated region
        $region57: #{tpu_custom_call.1} parent=43 // pred_check
          %p1218 = pneg %p185
        $region58: #{tpu_custom_call.1} parent=43 // pred_check_branch
          %1220 = sbr.rel (%p1218) target = $region60
        $region59: #{tpu_custom_call.1} parent=43 // pred_region
          %s1222 = ssub.s32 1024, 1024
          %1223 = vsyncadd %s1214, %s1222
          %s1224 = smul.addr %s28, 8
          %s1225 = smul.addr %s1224, 128
          %s1226 = scalar_lea.hbm %s6, %s1225
          %s1227 = sshll.u32 %s1217, 4
          %s1228 = int_to_ptr.vmem [resolvable:$true] %s1227
          %1233 = dma.vmem_to_hbm [thread:$0]  %s1228, 1024, %s1226, %s1214, 256, 256, 16
        $region60: #{tpu_custom_call.1} parent=43 // pred_fallthru
          _
      $region44: #{tpu_custom_call.1} parent=5 // pred_fallthru
        _
      %p1234 = scmp.le.s32.totalorder 2, %s19
      // Predicated region
      $region61: #{tpu_custom_call.1} parent=5 // pred_check
        %p1235 = pneg %p1234
      $region62: #{tpu_custom_call.1} parent=5 // pred_check_branch
        %1237 = sbr.rel (%p1235) target = $region64
      $region63: #{tpu_custom_call.1} parent=5 // pred_region
        %s1238 = ssub.s32 %s19, 2
        // Predicated region
        $region65: #{tpu_custom_call.1} parent=63 // pred_check
          %p1239 = pneg %p191
        $region66: #{tpu_custom_call.1} parent=63 // pred_check_branch
          %1241 = sbr.rel (%p1239) target = $region68
        $region67: #{tpu_custom_call.1} parent=63 // pred_region
          %s1242 = sand.u32 %s176, 1
          %s1243 = scalar_lea.sflag [#allocation7], %s1242
          %s1244 = sand.u32 %s176, 1
          %s1245 = smul.addr %s1244, 64
          %s1246 = scalar_lea.vmem [#allocation8], %s1245
          %1247 = dma.done %s1243, 1024
        $region68: #{tpu_custom_call.1} parent=63 // pred_fallthru
          _
      $region64: #{tpu_custom_call.1} parent=5 // pred_fallthru
        _
    $region6: #{tpu_custom_call.1} parent=1 // loop_footer
      %s23 = sadd.s32 1, %s19
    $region7: #{tpu_custom_call.1} parent=1 // loop_footer_branch
      %18 = sbr.rel target = $region3
    $region8: #{tpu_custom_call.1} parent=1 // loop_exit
      _
    %1248 = vsyncpa [#allocation6], 1
    %s1249 = scalar_lea.sflag [#allocation6], 1
    %1250 = vsyncpa %s1249, 1
    %1251 = vsyncpa [#allocation7], 1
    %s1252 = scalar_lea.sflag [#allocation7], 1
    %1253 = vsyncpa %s1252, 1

</llo_original>
